<compile_context>
chip_gen: v6e
topology: v6e:2x2x1
jax: 0.10.0
libtpu: 0.0.40
codegen_flags: <defaults>
</compile_context>

<pallas_src>
import functools

import jax
import jax.numpy as jnp
from jax.experimental import pallas as pl
from jax.experimental.pallas import tpu as pltpu


def _gaussian_policy_kernel(obs_ref, w1_ref, b1_ref, w2_ref, b2_ref,
                            w3_ref, b3_ref, mean_ref):
    """Fused MLP forward for one batch tile.

    obs_ref:  [TILE_B, obs_dim]
    w1/b1:    [obs_dim, H1], [1, H1]
    w2/b2:    [H1, H2],      [1, H2]
    w3/b3:    [H2, act_dim], [1, act_dim]
    mean_ref: [TILE_B, act_dim]   (output)
    """
    x = obs_ref[...]

    h1 = jnp.tanh(jnp.dot(x, w1_ref[...], preferred_element_type=jnp.float32)
                  + b1_ref[...])
    h2 = jnp.tanh(jnp.dot(h1, w2_ref[...], preferred_element_type=jnp.float32)
                  + b2_ref[...])
    mean = jnp.dot(h2, w3_ref[...], preferred_element_type=jnp.float32) + b3_ref[...]

    mean_ref[...] = mean.astype(mean_ref.dtype)


def gaussian_policy_forward(obs, params, *, tile_b=2048):
    """Returns (mean [B, act_dim], std [act_dim], scale_tril [act_dim, act_dim])."""
    w1, b1, w2, b2, w3, b3, logstd = params
    B, obs_dim = obs.shape
    act_dim = w3.shape[1]

    # Clamp the batch tile to the (sublane-rounded) batch size, then pad the
    # batch to a multiple of the tile so every grid step sees a full block.
    tile_b = int(min(tile_b, pl.cdiv(B, 8) * 8))
    b_pad = int(pl.cdiv(B, tile_b) * tile_b)
    if b_pad != B:
        obs = jnp.pad(obs, ((0, b_pad - B), (0, 0)))

    grid = (b_pad // tile_b,)

    def batched_spec(feat):
        # Tiled along batch (sublanes), full-extent along features (lanes).
        return pl.BlockSpec((tile_b, feat), lambda i: (i, 0))

    def resident_spec(shape):
        # Whole-array block, constant index_map -> stays resident in VMEM.
        return pl.BlockSpec(shape, lambda i: tuple(0 for _ in shape))

    mean = pl.pallas_call(
        _gaussian_policy_kernel,
        out_shape=jax.ShapeDtypeStruct((b_pad, act_dim), jnp.float32),
        grid=grid,
        in_specs=[
            batched_spec(obs_dim),
            resident_spec(w1.shape), resident_spec(b1.shape),
            resident_spec(w2.shape), resident_spec(b2.shape),
            resident_spec(w3.shape), resident_spec(b3.shape),
        ],
        out_specs=batched_spec(act_dim),
        compiler_params=pltpu.CompilerParams(
            dimension_semantics=("parallel",),   # lights up both TCs on v7x
            vmem_limit_bytes=32 << 20,
        ),
    )(obs, w1, b1, w2, b2, w3, b3)

    if b_pad != B:
        mean = mean[:B]

    # 8-element epilogue: cheaper as plain JAX than as a second kernel output.
    std = jnp.exp(logstd[0])
    scale_tril = jnp.diag(std)  # distribution parameterization glue
    return mean, std, scale_tril


def init_params(key, obs_dim, act_dim, layers=(64, 64)):
    """Deterministic synthetic init mimicking ptu.init_weights + scale_last_layer."""
    sizes = [obs_dim] + list(layers) + [act_dim]
    params = []
    keys = jax.random.split(key, len(sizes) - 1)
    for i, (fan_in, fan_out) in enumerate(zip(sizes[:-1], sizes[1:])):
        w = jax.random.normal(keys[i], (fan_in, fan_out), jnp.float32) * (1.0 / jnp.sqrt(fan_in))
        b = jnp.zeros((1, fan_out), jnp.float32)
        if i == len(sizes) - 2:
            w = w * 0.01  # ptu.scale_last_layer: shrink last layer weights
        params.extend([w, b])
    logstd = -0.5 * jnp.ones((1, act_dim), jnp.float32)  # nn.Parameter(-0.5 * ones(act_dim))
    params.append(logstd)
    return tuple(params)


def reference_forward(obs, params):
    """Pure-JAX reference of the same forward pass (for correctness checks)."""
    w1, b1, w2, b2, w3, b3, logstd = params
    h = jnp.tanh(obs @ w1 + b1)
    h = jnp.tanh(h @ w2 + b2)
    mean = h @ w3 + b3
    std = jnp.exp(logstd[0])
    return mean, std


if __name__ == "__main__":
    # Small shapes consistent with the module: obs_dim=16, act_dim=8, hidden [64, 64].
    B, OBS_DIM, ACT_DIM = 2, 16, 8

    key = jax.random.PRNGKey(0)
    k_params, k_obs, k_obs2 = jax.random.split(key, 3)
    params = init_params(k_params, OBS_DIM, ACT_DIM, layers=(64, 64))

    # --- small-batch case (B=2): tile clamps to 8, single grid step ---
    obs = jax.random.normal(k_obs, (B, OBS_DIM), jnp.float32)
    fwd = jax.jit(functools.partial(gaussian_policy_forward, params=params))
    mean, std, scale_tril = fwd(obs)
    jax.block_until_ready((mean, std, scale_tril))

    ref_mean, ref_std = reference_forward(obs, params)
    assert mean.shape == (B, ACT_DIM)
    assert std.shape == (ACT_DIM,)
    assert scale_tril.shape == (ACT_DIM, ACT_DIM)
    assert jnp.allclose(mean, ref_mean, atol=1e-5, rtol=1e-5)
    assert jnp.allclose(std, ref_std, atol=1e-6, rtol=1e-6)
    assert jnp.allclose(scale_tril, jnp.diag(ref_std), atol=1e-6, rtol=1e-6)

    # --- multi-step grid case: exercises the batch pipeline + edge padding ---
    B2, TILE2 = 200, 64          # grid of 4 steps, last tile partially padded
    obs2 = jax.random.normal(k_obs2, (B2, OBS_DIM), jnp.float32)
    fwd2 = jax.jit(functools.partial(gaussian_policy_forward, params=params, tile_b=TILE2))
    mean2, std2, _ = fwd2(obs2)
    jax.block_until_ready((mean2, std2))
    ref_mean2, _ = reference_forward(obs2, params)
    assert mean2.shape == (B2, ACT_DIM)
    assert jnp.allclose(mean2, ref_mean2, atol=1e-5, rtol=1e-5)

    # TODO(synk): MultivariateNormal sampling (act_dist.sample()) is random-number
    # glue outside the forward hot path and is not implemented as a kernel.
    print("KERNEL_OK")
</pallas_src>

<mosaic_0001>
module attributes {stable_mosaic.version = 11 : i64} {
  func.func @_gaussian_policy_kernel(%arg0: i32, %arg1: memref<8x16xf32, #tpu.memory_space<vmem>>, %arg2: memref<16x64xf32, #tpu.memory_space<vmem>>, %arg3: memref<1x64xf32, #tpu.memory_space<vmem>>, %arg4: memref<64x64xf32, #tpu.memory_space<vmem>>, %arg5: memref<1x64xf32, #tpu.memory_space<vmem>>, %arg6: memref<64x8xf32, #tpu.memory_space<vmem>>, %arg7: memref<1x8xf32, #tpu.memory_space<vmem>>, %arg8: memref<8x8xf32, #tpu.memory_space<vmem>>) attributes {dimension_semantics = [#tpu.dimension_semantics<parallel>], iteration_bounds = array<i64: 1>, scalar_prefetch = 0 : i64, scratch_operands = 0 : i64, tpu.core_type = #tpu.core_type<tc>, window_params = [{transform_indices = @transform_0, window_bounds = array<i64: 8, 16>}, {pipeline_mode = #tpu.pipeline_mode<synchronous>, transform_indices = @transform_1, window_bounds = array<i64: 16, 64>}, {pipeline_mode = #tpu.pipeline_mode<synchronous>, transform_indices = @transform_2, window_bounds = array<i64: 1, 64>}, {pipeline_mode = #tpu.pipeline_mode<synchronous>, transform_indices = @transform_3, window_bounds = array<i64: 64, 64>}, {pipeline_mode = #tpu.pipeline_mode<synchronous>, transform_indices = @transform_4, window_bounds = array<i64: 1, 64>}, {pipeline_mode = #tpu.pipeline_mode<synchronous>, transform_indices = @transform_5, window_bounds = array<i64: 64, 8>}, {pipeline_mode = #tpu.pipeline_mode<synchronous>, transform_indices = @transform_6, window_bounds = array<i64: 1, 8>}, {transform_indices = @transform_7, window_bounds = array<i64: 8, 8>}]} {
    %c0 = arith.constant 0 : index
    %c0_0 = arith.constant 0 : index
    %0 = vector.load %arg1[%c0, %c0_0] : memref<8x16xf32, #tpu.memory_space<vmem>>, vector<8x16xf32>
    %c0_1 = arith.constant 0 : index
    %c0_2 = arith.constant 0 : index
    %1 = vector.load %arg2[%c0_1, %c0_2] : memref<16x64xf32, #tpu.memory_space<vmem>>, vector<16x64xf32>
    %cst = arith.constant dense<0.000000e+00> : vector<8x64xf32>
    %2 = tpu.matmul %0, %1, %cst {dimension_numbers = #tpu.dot_dimension_numbers<[1], [0], [0], [1], [0, 0, 1, 1], [], []>} : vector<8x16xf32>, vector<16x64xf32>, vector<8x64xf32> -> vector<8x64xf32>
    %c0_3 = arith.constant 0 : index
    %c0_4 = arith.constant 0 : index
    %3 = vector.load %arg3[%c0_3, %c0_4] : memref<1x64xf32, #tpu.memory_space<vmem>>, vector<1x64xf32>
    %4 = vector.broadcast %3 : vector<1x64xf32> to vector<8x64xf32>
    %5 = arith.addf %2, %4 : vector<8x64xf32>
    %6 = math.tanh %5 : vector<8x64xf32>
    %c0_5 = arith.constant 0 : index
    %c0_6 = arith.constant 0 : index
    %7 = vector.load %arg4[%c0_5, %c0_6] : memref<64x64xf32, #tpu.memory_space<vmem>>, vector<64x64xf32>
    %cst_7 = arith.constant dense<0.000000e+00> : vector<8x64xf32>
    %8 = tpu.matmul %6, %7, %cst_7 {dimension_numbers = #tpu.dot_dimension_numbers<[1], [0], [0], [1], [0, 0, 1, 1], [], []>} : vector<8x64xf32>, vector<64x64xf32>, vector<8x64xf32> -> vector<8x64xf32>
    %c0_8 = arith.constant 0 : index
    %c0_9 = arith.constant 0 : index
    %9 = vector.load %arg5[%c0_8, %c0_9] : memref<1x64xf32, #tpu.memory_space<vmem>>, vector<1x64xf32>
    %10 = vector.broadcast %9 : vector<1x64xf32> to vector<8x64xf32>
    %11 = arith.addf %8, %10 : vector<8x64xf32>
    %12 = math.tanh %11 : vector<8x64xf32>
    %c0_10 = arith.constant 0 : index
    %c0_11 = arith.constant 0 : index
    %13 = vector.load %arg6[%c0_10, %c0_11] : memref<64x8xf32, #tpu.memory_space<vmem>>, vector<64x8xf32>
    %cst_12 = arith.constant dense<0.000000e+00> : vector<8x8xf32>
    %14 = tpu.matmul %12, %13, %cst_12 {dimension_numbers = #tpu.dot_dimension_numbers<[1], [0], [0], [1], [0, 0, 1, 1], [], []>} : vector<8x64xf32>, vector<64x8xf32>, vector<8x8xf32> -> vector<8x8xf32>
    %c0_13 = arith.constant 0 : index
    %c0_14 = arith.constant 0 : index
    %15 = vector.load %arg7[%c0_13, %c0_14] : memref<1x8xf32, #tpu.memory_space<vmem>>, vector<1x8xf32>
    %16 = vector.broadcast %15 : vector<1x8xf32> to vector<8x8xf32>
    %17 = arith.addf %14, %16 : vector<8x8xf32>
    %c0_15 = arith.constant 0 : index
    %c0_16 = arith.constant 0 : index
    %18 = vector.load %arg8[%c0_15, %c0_16] : memref<8x8xf32, #tpu.memory_space<vmem>>, vector<8x8xf32>
    tpu.vector_store %arg8[%c0_15, %c0_16], %17 {strides = array<i32>} : memref<8x8xf32, #tpu.memory_space<vmem>>, vector<8x8xf32>,
    return
  }
  func.func @transform_0(%arg0: i32) -> (i32, i32) {
    %c0_i32 = arith.constant 0 : i32
    %c0_i32_0 = arith.constant 0 : i32
    return %arg0, %c0_i32 : i32, i32
  }
  func.func @transform_1(%arg0: i32) -> (i32, i32) {
    %c0_i32 = arith.constant 0 : i32
    %c0_i32_0 = arith.constant 0 : i32
    %c0_i32_1 = arith.constant 0 : i32
    return %c0_i32, %c0_i32_0 : i32, i32
  }
  func.func @transform_2(%arg0: i32) -> (i32, i32) {
    %c0_i32 = arith.constant 0 : i32
    %c0_i32_0 = arith.constant 0 : i32
    %c0_i32_1 = arith.constant 0 : i32
    return %c0_i32, %c0_i32_0 : i32, i32
  }
  func.func @transform_3(%arg0: i32) -> (i32, i32) {
    %c0_i32 = arith.constant 0 : i32
    %c0_i32_0 = arith.constant 0 : i32
    %c0_i32_1 = arith.constant 0 : i32
    return %c0_i32, %c0_i32_0 : i32, i32
  }
  func.func @transform_4(%arg0: i32) -> (i32, i32) {
    %c0_i32 = arith.constant 0 : i32
    %c0_i32_0 = arith.constant 0 : i32
    %c0_i32_1 = arith.constant 0 : i32
    return %c0_i32, %c0_i32_0 : i32, i32
  }
  func.func @transform_5(%arg0: i32) -> (i32, i32) {
    %c0_i32 = arith.constant 0 : i32
    %c0_i32_0 = arith.constant 0 : i32
    %c0_i32_1 = arith.constant 0 : i32
    return %c0_i32, %c0_i32_0 : i32, i32
  }
  func.func @transform_6(%arg0: i32) -> (i32, i32) {
    %c0_i32 = arith.constant 0 : i32
    %c0_i32_0 = arith.constant 0 : i32
    %c0_i32_1 = arith.constant 0 : i32
    return %c0_i32, %c0_i32_0 : i32, i32
  }
  func.func @transform_7(%arg0: i32) -> (i32, i32) {
    %c0_i32 = arith.constant 0 : i32
    %c0_i32_0 = arith.constant 0 : i32
    return %arg0, %c0_i32 : i32, i32
  }
}

</mosaic_0001>

<llo_original>
// kernel: gaussian_policy_forward.1
$region0: #{gaussian_policy_forward.1}
  #allocation0 [shape = 'u32[]', space=smem, size = 0x4, offset = 0x4, fixed_abs, tag = 'smem constant byte address 0x4 - core index']
  #allocation1 [shape = 'u32[144,128]{1,0:T(1,128)}', space=vmem, size = 0x12000, scoped, tag = 'internal scratch']
  %s0 = inlined_call_operand.vmem [shape: f32[8,16], index: 0, kind: input, shape index: {}]
  %s1 = inlined_call_operand.vmem [shape: f32[16,64], index: 1, kind: input, shape index: {}]
  %s2 = inlined_call_operand.vmem [shape: f32[1,64], index: 2, kind: input, shape index: {}, may-alias: {2,4}]
  %s3 = inlined_call_operand.hbm [shape: f32[64,64], index: 3, kind: input, shape index: {}]
  %s4 = inlined_call_operand.vmem [shape: f32[1,64], index: 4, kind: input, shape index: {}, may-alias: {2,4}]
  %s5 = inlined_call_operand.hbm [shape: f32[64,8], index: 5, kind: input, shape index: {}]
  %s6 = inlined_call_operand.vmem [shape: f32[1,8], index: 6, kind: input, shape index: {}]
  %s7 = inlined_call_operand.vmem [shape: f32[8,8], index: 7, kind: output, shape index: {}]
  %s8 = sld [smem:[#allocation0]]
  $region46: #{gaussian_policy_forward.1} parent=0
    _
  %s10 = ssub.s32 1, %s8
  %s11 = scalar_select 0, %s10, %s8
  $region1: #{gaussian_policy_forward.1} parent=0
    #allocation2 [shape = 'u8[32768]{0}', space=vmem, size = 0x8000, scoped, tag = 'input window, operand 3, single buffered']
    #allocation3 [shape = 's32[1]{0}', space=sflag, size = 0x4, scoped, tag = 'scoped memory for gaussian_policy_forward.1']
    #allocation4 [shape = 'u8[32768]{0}', space=vmem, size = 0x8000, scoped, tag = 'input window, operand 5, single buffered']
    #allocation5 [shape = 's32[1]{0}', space=sflag, size = 0x4, scoped, tag = 'scoped memory for gaussian_policy_forward.1']
    %12 = vsyncpa [#allocation3], 0
    %13 = vsyncpa [#allocation5], 0
    // Predicated region
    $region2: #{gaussian_policy_forward.1} parent=1 // pred_check
      _
    $region3: #{gaussian_policy_forward.1} parent=1 // pred_check_branch
      %15 = sbr.rel (0) target = $region5
    $region4: #{gaussian_policy_forward.1} parent=1 // pred_region
      _
    $region5: #{gaussian_policy_forward.1} parent=1 // pred_fallthru
      _
    // Predicated region
    $region6: #{gaussian_policy_forward.1} parent=1 // pred_check
      _
    $region7: #{gaussian_policy_forward.1} parent=1 // pred_check_branch
      %17 = sbr.rel (0) target = $region9
    $region8: #{gaussian_policy_forward.1} parent=1 // pred_region
      _
    $region9: #{gaussian_policy_forward.1} parent=1 // pred_fallthru
      _
    // Predicated region
    $region10: #{gaussian_policy_forward.1} parent=1 // pred_check
      _
    $region11: #{gaussian_policy_forward.1} parent=1 // pred_check_branch
      %19 = sbr.rel (0) target = $region13
    $region12: #{gaussian_policy_forward.1} parent=1 // pred_region
      _
    $region13: #{gaussian_policy_forward.1} parent=1 // pred_fallthru
      _
    // Predicated region
    $region14: #{gaussian_policy_forward.1} parent=1 // pred_check
      _
    $region15: #{gaussian_policy_forward.1} parent=1 // pred_check_branch
      %21 = sbr.rel (0) target = $region17
    $region16: #{gaussian_policy_forward.1} parent=1 // pred_region
      %s23 = ssub.s32 1024, 1024
      %24 = vsyncadd [#allocation3], %s23
      %s25 = sshll.u32 [#allocation2], 4
      %s26 = int_to_ptr.vmem [resolvable:$true] %s25
      %31 = dma.hbm_to_vmem [thread:$0]  %s3, 1024, %s26, [#allocation3], 128, 128, 8
    $region17: #{gaussian_policy_forward.1} parent=1 // pred_fallthru
      _
    // Predicated region
    $region18: #{gaussian_policy_forward.1} parent=1 // pred_check
      _
    $region19: #{gaussian_policy_forward.1} parent=1 // pred_check_branch
      %33 = sbr.rel (0) target = $region21
    $region20: #{gaussian_policy_forward.1} parent=1 // pred_region
      _
    $region21: #{gaussian_policy_forward.1} parent=1 // pred_fallthru
      _
    // Predicated region
    $region22: #{gaussian_policy_forward.1} parent=1 // pred_check
      _
    $region23: #{gaussian_policy_forward.1} parent=1 // pred_check_branch
      %35 = sbr.rel (0) target = $region25
    $region24: #{gaussian_policy_forward.1} parent=1 // pred_region
      %s37 = ssub.s32 1024, 1024
      %38 = vsyncadd [#allocation5], %s37
      %s39 = sshll.u32 [#allocation4], 4
      %s40 = int_to_ptr.vmem [resolvable:$true] %s39
      %45 = dma.hbm_to_vmem [thread:$0]  %s5, 1024, %s40, [#allocation5], 128, 128, 8
    $region25: #{gaussian_policy_forward.1} parent=1 // pred_fallthru
      _
    // Predicated region
    $region26: #{gaussian_policy_forward.1} parent=1 // pred_check
      _
    $region27: #{gaussian_policy_forward.1} parent=1 // pred_check_branch
      %47 = sbr.rel (0) target = $region29
    $region28: #{gaussian_policy_forward.1} parent=1 // pred_region
      _
    $region29: #{gaussian_policy_forward.1} parent=1 // pred_fallthru
      _
    // Predicated region
    $region30: #{gaussian_policy_forward.1} parent=1 // pred_check
      _
    $region31: #{gaussian_policy_forward.1} parent=1 // pred_check_branch
      %49 = sbr.rel (0) target = $region33
    $region32: #{gaussian_policy_forward.1} parent=1 // pred_region
      %50 = dma.done [#allocation3], 1024
    $region33: #{gaussian_policy_forward.1} parent=1 // pred_fallthru
      _
    // Predicated region
    $region34: #{gaussian_policy_forward.1} parent=1 // pred_check
      _
    $region35: #{gaussian_policy_forward.1} parent=1 // pred_check_branch
      %52 = sbr.rel (0) target = $region37
    $region36: #{gaussian_policy_forward.1} parent=1 // pred_region
      %53 = dma.done [#allocation5], 1024
    $region37: #{gaussian_policy_forward.1} parent=1 // pred_fallthru
      _
    %v54 = vld [vmem:[%s0] sm:$0xff]
    %v55 = vld [vmem:[%s1] sm:$0xff]
    %v56 = vld [vmem:[%s1 + $0x8] sm:$0xff]
    %v57 = vld [vmem:[%s2] sm:$0x1]
    %v59 = vlaneseq
    %v60 = vshrl.u32 %v59, 7
    %v61 = vsub.s32 0, %v60
    %v62 = vrot.slane %v57, %v61
    %vm64 = vcmask 130048
    %v66 = vsel %vm64, %v54, 0
    %68 = vmatprep.subr.mxu0 0.0
    %69 = vmatpush1.msra.mxu0 0.0
    %70 = vmatprep.subr.mxu0 0.0
    %71 = vmatpush1.msra.mxu0 0.0
    %72 = vmatprep.subr.mxu0 0.0
    %73 = vmatpush1.msra.mxu0 0.0
    %74 = vmatprep.subr.mxu0 0.0
    %75 = vmatpush1.msra.mxu0 0.0
    %76 = vmatprep.subr.mxu0 0.0
    %77 = vmatpush1.msra.mxu0 0.0
    %78 = vmatprep.subr.mxu0 0.0
    %79 = vmatpush1.msra.mxu0 0.0
    %80 = vmatprep.subr.mxu0 0.0
    %81 = vmatpush1.msra.mxu0 0.0
    %82 = vmatprep.subr.mxu0 0.0
    %83 = vmatpush1.msra.mxu0 0.0
    %84 = vmatprep.subr.mxu0 0.0
    %85 = vmatpush1.msra.mxu0 0.0
    %86 = vmatprep.subr.mxu0 0.0
    %87 = vmatpush1.msra.mxu0 0.0
    %88 = vmatprep.subr.mxu0 0.0
    %89 = vmatpush1.msra.mxu0 0.0
    %90 = vmatprep.subr.mxu0 0.0
    %91 = vmatpush1.msra.mxu0 0.0
    %92 = vmatprep.subr.mxu0 0.0
    %93 = vmatpush1.msra.mxu0 0.0
    %94 = vmatprep.subr.mxu0 0.0
    %95 = vmatpush1.msra.mxu0 0.0
    %96 = vmatprep.subr.mxu0 0.0
    %97 = vmatpush1.msra.mxu0 %v56
    %98 = vmatprep.subr.mxu0 0.0
    %99 = vmatpush1.msra.mxu0 %v55
    %100 = vmatprep.subr.mxu0 0.0
    %101 = vmatpush2.msra.mxu0 0.0
    %102 = vmatprep.subr.mxu0 0.0
    %103 = vmatpush2.msra.mxu0 0.0
    %104 = vmatprep.subr.mxu0 0.0
    %105 = vmatpush2.msra.mxu0 0.0
    %106 = vmatprep.subr.mxu0 0.0
    %107 = vmatpush2.msra.mxu0 0.0
    %108 = vmatprep.subr.mxu0 0.0
    %109 = vmatpush2.msra.mxu0 0.0
    %110 = vmatprep.subr.mxu0 0.0
    %111 = vmatpush2.msra.mxu0 0.0
    %112 = vmatprep.subr.mxu0 0.0
    %113 = vmatpush2.msra.mxu0 0.0
    %114 = vmatprep.subr.mxu0 0.0
    %115 = vmatpush2.msra.mxu0 0.0
    %116 = vmatprep.subr.mxu0 0.0
    %117 = vmatpush2.msra.mxu0 0.0
    %118 = vmatprep.subr.mxu0 0.0
    %119 = vmatpush2.msra.mxu0 0.0
    %120 = vmatprep.subr.mxu0 0.0
    %121 = vmatpush2.msra.mxu0 0.0
    %122 = vmatprep.subr.mxu0 0.0
    %123 = vmatpush2.msra.mxu0 0.0
    %124 = vmatprep.subr.mxu0 0.0
    %125 = vmatpush2.msra.mxu0 0.0
    %126 = vmatprep.subr.mxu0 0.0
    %127 = vmatpush2.msra.mxu0 0.0
    %128 = vmatprep.subr.mxu0 0.0
    %129 = vmatpush2.msra.mxu0 0.0
    %130 = vmatprep.subr.mxu0 0.0
    %131 = vmatpush2.msra.mxu0 0.0
    %132 = vmatprep.mubr.f32.mxu0 0.0
    %133 = vmatmul.mubr.f32.gmra.mxu0 %v66
    %v134 = vpop.f32.mrf.mxu0
    %v135 = vadd.f32 %v62, %v134
    %v136 = vpop.f32.mrf.mxu0
    %137 = vdwg.mxu0
    %v138 = vtanh.pop %v135
    %v139 = vld [vmem:[#allocation2] sm:$0xff]
    %v140 = vld [vmem:[#allocation2 + $0x8] sm:$0xff]
    %v141 = vld [vmem:[#allocation2 + $0x10] sm:$0xff]
    %v142 = vld [vmem:[#allocation2 + $0x18] sm:$0xff]
    %v143 = vld [vmem:[#allocation2 + $0x20] sm:$0xff]
    %v144 = vld [vmem:[#allocation2 + $0x28] sm:$0xff]
    %v145 = vld [vmem:[#allocation2 + $0x30] sm:$0xff]
    %v146 = vld [vmem:[#allocation2 + $0x38] sm:$0xff]
    %v147 = vld [vmem:[%s4] sm:$0x1]
    %v149 = vlaneseq
    %v150 = vshrl.u32 %v149, 7
    %v151 = vsub.s32 0, %v150
    %v152 = vrot.slane %v147, %v151
    %vm154 = vcmask 523264
    %v156 = vsel %vm154, %v138, 0
    %158 = vmatprep.subr.mxu0 0.0
    %159 = vmatpush1.msra.mxu0 0.0
    %160 = vmatprep.subr.mxu0 0.0
    %161 = vmatpush1.msra.mxu0 0.0
    %162 = vmatprep.subr.mxu0 0.0
    %163 = vmatpush1.msra.mxu0 0.0
    %164 = vmatprep.subr.mxu0 0.0
    %165 = vmatpush1.msra.mxu0 0.0
    %166 = vmatprep.subr.mxu0 0.0
    %167 = vmatpush1.msra.mxu0 0.0
    %168 = vmatprep.subr.mxu0 0.0
    %169 = vmatpush1.msra.mxu0 0.0
    %170 = vmatprep.subr.mxu0 0.0
    %171 = vmatpush1.msra.mxu0 0.0
    %172 = vmatprep.subr.mxu0 0.0
    %173 = vmatpush1.msra.mxu0 0.0
    %174 = vmatprep.subr.mxu0 0.0
    %175 = vmatpush1.msra.mxu0 %v146
    %176 = vmatprep.subr.mxu0 0.0
    %177 = vmatpush1.msra.mxu0 %v145
    %178 = vmatprep.subr.mxu0 0.0
    %179 = vmatpush1.msra.mxu0 %v144
    %180 = vmatprep.subr.mxu0 0.0
    %181 = vmatpush1.msra.mxu0 %v143
    %182 = vmatprep.subr.mxu0 0.0
    %183 = vmatpush1.msra.mxu0 %v142
    %184 = vmatprep.subr.mxu0 0.0
    %185 = vmatpush1.msra.mxu0 %v141
    %186 = vmatprep.subr.mxu0 0.0
    %187 = vmatpush1.msra.mxu0 %v140
    %188 = vmatprep.subr.mxu0 0.0
    %189 = vmatpush1.msra.mxu0 %v139
    %190 = vmatprep.subr.mxu0 0.0
    %191 = vmatpush2.msra.mxu0 0.0
    %192 = vmatprep.subr.mxu0 0.0
    %193 = vmatpush2.msra.mxu0 0.0
    %194 = vmatprep.subr.mxu0 0.0
    %195 = vmatpush2.msra.mxu0 0.0
    %196 = vmatprep.subr.mxu0 0.0
    %197 = vmatpush2.msra.mxu0 0.0
    %198 = vmatprep.subr.mxu0 0.0
    %199 = vmatpush2.msra.mxu0 0.0
    %200 = vmatprep.subr.mxu0 0.0
    %201 = vmatpush2.msra.mxu0 0.0
    %202 = vmatprep.subr.mxu0 0.0
    %203 = vmatpush2.msra.mxu0 0.0
    %204 = vmatprep.subr.mxu0 0.0
    %205 = vmatpush2.msra.mxu0 0.0
    %206 = vmatprep.subr.mxu0 0.0
    %207 = vmatpush2.msra.mxu0 0.0
    %208 = vmatprep.subr.mxu0 0.0
    %209 = vmatpush2.msra.mxu0 0.0
    %210 = vmatprep.subr.mxu0 0.0
    %211 = vmatpush2.msra.mxu0 0.0
    %212 = vmatprep.subr.mxu0 0.0
    %213 = vmatpush2.msra.mxu0 0.0
    %214 = vmatprep.subr.mxu0 0.0
    %215 = vmatpush2.msra.mxu0 0.0
    %216 = vmatprep.subr.mxu0 0.0
    %217 = vmatpush2.msra.mxu0 0.0
    %218 = vmatprep.subr.mxu0 0.0
    %219 = vmatpush2.msra.mxu0 0.0
    %220 = vmatprep.subr.mxu0 0.0
    %221 = vmatpush2.msra.mxu0 0.0
    %222 = vmatprep.mubr.f32.mxu0 0.0
    %223 = vmatmul.mubr.f32.gmra.mxu0 %v156
    %v224 = vpop.f32.mrf.mxu0
    %v225 = vadd.f32 %v152, %v224
    %v226 = vpop.f32.mrf.mxu0
    %227 = vdwg.mxu0
    %v228 = vtanh.pop %v225
    %v229 = vld [vmem:[#allocation4] sm:$0xff]
    %v230 = vld [vmem:[#allocation4 + $0x8] sm:$0xff]
    %v231 = vld [vmem:[#allocation4 + $0x10] sm:$0xff]
    %v232 = vld [vmem:[#allocation4 + $0x18] sm:$0xff]
    %v233 = vld [vmem:[#allocation4 + $0x20] sm:$0xff]
    %v234 = vld [vmem:[#allocation4 + $0x28] sm:$0xff]
    %v235 = vld [vmem:[#allocation4 + $0x30] sm:$0xff]
    %v236 = vld [vmem:[#allocation4 + $0x38] sm:$0xff]
    %v237 = vld [vmem:[%s6] sm:$0x1]
    %v239 = vlaneseq
    %v240 = vshrl.u32 %v239, 7
    %v241 = vsub.s32 0, %v240
    %v242 = vrot.slane %v237, %v241
    %v245 = vsel %vm154, %v228, 0
    %247 = vmatprep.subr.mxu0 0.0
    %248 = vmatpush1.msra.mxu0 0.0
    %249 = vmatprep.subr.mxu0 0.0
    %250 = vmatpush1.msra.mxu0 0.0
    %251 = vmatprep.subr.mxu0 0.0
    %252 = vmatpush1.msra.mxu0 0.0
    %253 = vmatprep.subr.mxu0 0.0
    %254 = vmatpush1.msra.mxu0 0.0
    %255 = vmatprep.subr.mxu0 0.0
    %256 = vmatpush1.msra.mxu0 0.0
    %257 = vmatprep.subr.mxu0 0.0
    %258 = vmatpush1.msra.mxu0 0.0
    %259 = vmatprep.subr.mxu0 0.0
    %260 = vmatpush1.msra.mxu0 0.0
    %261 = vmatprep.subr.mxu0 0.0
    %262 = vmatpush1.msra.mxu0 0.0
    %263 = vmatprep.subr.mxu0 0.0
    %264 = vmatpush1.msra.mxu0 %v236
    %265 = vmatprep.subr.mxu0 0.0
    %266 = vmatpush1.msra.mxu0 %v235
    %267 = vmatprep.subr.mxu0 0.0
    %268 = vmatpush1.msra.mxu0 %v234
    %269 = vmatprep.subr.mxu0 0.0
    %270 = vmatpush1.msra.mxu0 %v233
    %271 = vmatprep.subr.mxu0 0.0
    %272 = vmatpush1.msra.mxu0 %v232
    %273 = vmatprep.subr.mxu0 0.0
    %274 = vmatpush1.msra.mxu0 %v231
    %275 = vmatprep.subr.mxu0 0.0
    %276 = vmatpush1.msra.mxu0 %v230
    %277 = vmatprep.subr.mxu0 0.0
    %278 = vmatpush1.msra.mxu0 %v229
    %279 = vmatprep.subr.mxu0 0.0
    %280 = vmatpush2.msra.mxu0 0.0
    %281 = vmatprep.subr.mxu0 0.0
    %282 = vmatpush2.msra.mxu0 0.0
    %283 = vmatprep.subr.mxu0 0.0
    %284 = vmatpush2.msra.mxu0 0.0
    %285 = vmatprep.subr.mxu0 0.0
    %286 = vmatpush2.msra.mxu0 0.0
    %287 = vmatprep.subr.mxu0 0.0
    %288 = vmatpush2.msra.mxu0 0.0
    %289 = vmatprep.subr.mxu0 0.0
    %290 = vmatpush2.msra.mxu0 0.0
    %291 = vmatprep.subr.mxu0 0.0
    %292 = vmatpush2.msra.mxu0 0.0
    %293 = vmatprep.subr.mxu0 0.0
    %294 = vmatpush2.msra.mxu0 0.0
    %295 = vmatprep.subr.mxu0 0.0
    %296 = vmatpush2.msra.mxu0 0.0
    %297 = vmatprep.subr.mxu0 0.0
    %298 = vmatpush2.msra.mxu0 0.0
    %299 = vmatprep.subr.mxu0 0.0
    %300 = vmatpush2.msra.mxu0 0.0
    %301 = vmatprep.subr.mxu0 0.0
    %302 = vmatpush2.msra.mxu0 0.0
    %303 = vmatprep.subr.mxu0 0.0
    %304 = vmatpush2.msra.mxu0 0.0
    %305 = vmatprep.subr.mxu0 0.0
    %306 = vmatpush2.msra.mxu0 0.0
    %307 = vmatprep.subr.mxu0 0.0
    %308 = vmatpush2.msra.mxu0 0.0
    %309 = vmatprep.subr.mxu0 0.0
    %310 = vmatpush2.msra.mxu0 0.0
    %311 = vmatprep.mubr.f32.mxu0 0.0
    %312 = vmatmul.mubr.f32.gmra.mxu0 %v245
    %v313 = vpop.f32.mrf.mxu0
    %v314 = vadd.f32 %v242, %v313
    %v315 = vpop.f32.mrf.mxu0
    %316 = vdwg.mxu0
    %vm317 = vcmask 64512
    %318 = vst.msk [vmem:[%s7] sm:$0xff] %vm317, %v314
    // Predicated region
    $region38: #{gaussian_policy_forward.1} parent=1 // pred_check
      _
    $region39: #{gaussian_policy_forward.1} parent=1 // pred_check_branch
      %320 = sbr.rel (0) target = $region41
    $region40: #{gaussian_policy_forward.1} parent=1 // pred_region
      _
    $region41: #{gaussian_policy_forward.1} parent=1 // pred_fallthru
      _
    // Predicated region
    $region42: #{gaussian_policy_forward.1} parent=1 // pred_check
      _
    $region43: #{gaussian_policy_forward.1} parent=1 // pred_check_branch
      %322 = sbr.rel (0) target = $region45
    $region44: #{gaussian_policy_forward.1} parent=1 // pred_region
      _
    $region45: #{gaussian_policy_forward.1} parent=1 // pred_fallthru
      _
    %323 = vsyncpa [#allocation3], 1
    %324 = vsyncpa [#allocation5], 1

</llo_original>
